<compile_context>
chip_gen: v5e
topology: v5e:2x2
jax: 0.10.0
libtpu: 0.0.40
codegen_flags: <defaults>
</compile_context>

<pallas_src>
import jax
import jax.numpy as jnp
import numpy as np
from jax.experimental import pallas as pl
from jax.experimental.pallas import tpu as pltpu


def make_feature_loss_kernel(H, W, N, Ct, temp, alpha, has_align):
    f32 = jnp.float32
    bf16 = jnp.bfloat16
    HW = H * W
    taps = [(dy, dx) for dy in (-1, 0, 1) for dx in (-1, 0, 1)]  # ky, kx order

    def kernel(*refs):
        if has_align:
            (wa_ref, ba_ref, w1_ref, b1_ref, w2_ref, b2_ref,
             m_ref, s_ref, t_ref, nz_ref, out_ref) = refs
        else:
            (w1_ref, b1_ref, w2_ref, b2_ref,
             m_ref, s_ref, t_ref, nz_ref, out_ref) = refs

        t = t_ref[...]            # (R, HW) f32; R = N*Ctp rows, HW on lanes
        noise = nz_ref[...]       # (R, HW) f32 (per-batch noise, bcast over C)

        # ---- 1x1 align conv: ONE block-diagonal MXU matmul for all batches -
        if has_align:
            aligned = jnp.dot(wa_ref[...], s_ref[...],        # bf16 x bf16
                              preferred_element_type=f32) + ba_ref[...]
        else:
            aligned = s_ref[...]
        # gaused_fea = preds_S + N(0,1) noise
        gaused = aligned + noise                              # (R, HW) f32

        # ---- 3x3 "same" conv: XLU lane rolls + one im2col matmul -----------
        # Each row is one (batch, channel) image, so a lane roll never mixes
        # batches; the per-tap boundary mask zeroes exactly the wrapped lanes.
        def conv3x3(z, wm_ref, b_ref):
            cols = []
            for tap, (dy, dx) in enumerate(taps):
                off = dy * W + dx
                mask = m_ref[tap:tap + 1, :]                  # (1, HW) {0,1}
                if off == 0:
                    shifted = z
                else:
                    # result[:, i] = z[:, (i + off) % HW]  (wrap is masked)
                    shifted = pltpu.roll(z, shift=(-off) % HW, axis=1)
                cols.append(shifted * mask)
            patches = jnp.concatenate(cols, axis=0).astype(bf16)   # (9R, HW)
            return jnp.dot(wm_ref[...], patches,
                           preferred_element_type=f32) + b_ref[...]

        # self.generation = Conv3x3 -> ReLU -> Conv3x3
        h1 = jnp.maximum(conv3x3(gaused, w1_ref, b1_ref), 0.0)
        new_fea = conv3x3(h1, w2_ref, b2_ref)                 # (R, HW) f32

        # ---- ChannelNorm (softmax over each image's HW) + KL ---------------
        inv_t = 1.0 / temp
        s_sc = new_fea * inv_t
        t_sc = t * inv_t

        ms = jnp.max(s_sc, axis=-1, keepdims=True)            # (R, 1)
        zs = jnp.sum(jnp.exp(s_sc - ms), axis=-1, keepdims=True)
        mt = jnp.max(t_sc, axis=-1, keepdims=True)
        et = jnp.exp(t_sc - mt)
        zt = jnp.sum(et, axis=-1, keepdims=True)

        # log_pt - log_ps, with per-row stabilizers folded back in.
        diff = (t_sc - s_sc) - (mt - ms) - (jnp.log(zt) - jnp.log(zs))
        # KLDivLoss(reduction='sum') per row: sum_i pt_i*(log_pt_i - log_ps_i)
        kl_row = jnp.sum(et * diff, axis=-1, keepdims=True) / zt      # (R, 1)

        # (/ (N*C)) * temp**2 * alpha_gdd, reduced to one scalar in-kernel.
        scale = (temp * temp) * alpha / (N * Ct)
        out_ref[...] = jnp.sum(kl_row, axis=0, keepdims=True) * scale

    return kernel


def feature_loss(preds_S, preds_T, params, noise, *, alpha_gdd=145.0, temp_gdd=4.0):
    N, Cs, H, W = preds_S.shape
    Nt, Ct, Ht, Wt = preds_T.shape
    assert (N, H, W) == (Nt, Ht, Wt)
    HW = H * W
    has_align = Cs != Ct

    f32, bf16 = jnp.float32, jnp.bfloat16

    def round_up(x, m):
        return ((x + m - 1) // m) * m

    # Pad channel counts to a multiple of 8 so row stacking is sublane aligned.
    Ctp = round_up(Ct, 8)
    Csp = round_up(Cs, 8) if has_align else Ctp
    R = N * Ctp            # teacher-channel rows (batch folded onto sublanes)
    Rs = N * Csp           # student-channel rows

    # ---- data: (N*Cpad, HW); batches stacked along rows, HW on lanes -------
    def stack_rows(x, C, Cp, dtype):
        buf = jnp.zeros((N, Cp, HW), dtype)
        buf = buf.at[:, :C, :].set(x.astype(dtype).reshape(N, C, HW))
        return buf.reshape(N * Cp, HW)

    t_rows = stack_rows(preds_T, Ct, Ctp, f32)
    nz_rows = stack_rows(jnp.broadcast_to(noise.reshape(N, 1, H, W),
                                          (N, Ct, H, W)), Ct, Ctp, f32)
    if has_align:
        # Only consumed by the bf16 align matmul -> pre-cast (halves its DMA).
        s_rows = stack_rows(preds_S, Cs, Csp, bf16)
    else:
        s_rows = stack_rows(preds_S, Ct, Ctp, f32)

    # ---- block-diagonal weights: one MXU matmul covers all batches ---------
    def block_diag(w, Cop, Cip):                    # w: (Co, Ci)
        Co, Ci = w.shape
        out = jnp.zeros((N * Cop, N * Cip), f32)
        for b in range(N):
            out = out.at[b * Cop:b * Cop + Co, b * Cip:b * Cip + Ci].set(
                w.astype(f32))
        return out

    def conv_w_im2col(w):                           # (Ct, Ct, 3, 3) OIHW
        blocks = [block_diag(w[:, :, ky, kx], Ctp, Ctp)
                  for ky in range(3) for kx in range(3)]
        return jnp.concatenate(blocks, axis=1).astype(bf16)        # (R, 9R)

    def pad_bias(b, C, Cp):
        buf = jnp.zeros((N, Cp), f32)
        buf = buf.at[:, :C].set(jnp.broadcast_to(b.astype(f32), (N, C)))
        return buf.reshape(N * Cp, 1)

    w1m = conv_w_im2col(params["gen1_w"])
    w2m = conv_w_im2col(params["gen2_w"])
    b1 = pad_bias(params["gen1_b"], Ct, Ctp)
    b2 = pad_bias(params["gen2_b"], Ct, Ctp)

    # ---- per-tap boundary masks for "same" padding, (9, HW), tap-major -----
    yy, xx = np.mgrid[0:H, 0:W]
    mask_list = []
    for dy in (-1, 0, 1):
        for dx in (-1, 0, 1):
            ok = ((yy + dy >= 0) & (yy + dy < H) &
                  (xx + dx >= 0) & (xx + dx < W))
            mask_list.append(ok.reshape(-1))
    tap_masks = jnp.asarray(np.stack(mask_list), dtype=np.float32)  # (9, HW)

    in_specs, args = [], []
    if has_align:
        wa = block_diag(params["align_w"], Ctp, Csp).astype(bf16)   # (R, Rs)
        ba = pad_bias(params["align_b"], Ct, Ctp)
        in_specs += [pl.BlockSpec((R, Rs), lambda i: (0, 0)),
                     pl.BlockSpec((R, 1), lambda i: (0, 0))]
        args += [wa, ba]
    in_specs += [pl.BlockSpec((R, 9 * R), lambda i: (0, 0)),
                 pl.BlockSpec((R, 1), lambda i: (0, 0)),
                 pl.BlockSpec((R, 9 * R), lambda i: (0, 0)),
                 pl.BlockSpec((R, 1), lambda i: (0, 0)),
                 pl.BlockSpec((9, HW), lambda i: (0, 0)),
                 pl.BlockSpec((Rs if has_align else R, HW), lambda i: (0, 0)),
                 pl.BlockSpec((R, HW), lambda i: (0, 0)),
                 pl.BlockSpec((R, HW), lambda i: (0, 0))]
    args += [w1m, b1, w2m, b2, tap_masks, s_rows, t_rows, nz_rows]

    kernel = make_feature_loss_kernel(H, W, N, Ct,
                                      float(temp_gdd), float(alpha_gdd),
                                      has_align)

    # Advisory cost estimate (keeps XLA from over-serializing around the call).
    flops = 2 * (2 * R * (9 * R) * HW)              # two im2col 3x3 matmuls
    if has_align:
        flops += 2 * R * Rs * HW
    flops += 30 * R * HW                            # shifts/masks/softmax/KL
    transcendentals = 4 * R * HW                    # exps + logs
    bytes_accessed = int(sum(int(a.size) * a.dtype.itemsize for a in args)) + 4

    out = pl.pallas_call(
        kernel,
        out_shape=jax.ShapeDtypeStruct((1, 1), jnp.float32),
        grid=(1,),
        in_specs=in_specs,
        out_specs=pl.BlockSpec((1, 1), lambda i: (0, 0)),
        compiler_params=pltpu.CompilerParams(
            dimension_semantics=("arbitrary",)),
        cost_estimate=pl.CostEstimate(flops=int(flops),
                                      transcendentals=int(transcendentals),
                                      bytes_accessed=bytes_accessed),
    )(*args)
    return out[0, 0]


def feature_loss_ref(preds_S, preds_T, params, noise, *, alpha_gdd=145.0, temp_gdd=4.0):
    """Pure-JAX reference mirroring the PyTorch module."""
    N, Ct, H, W = preds_T.shape
    x = preds_S.astype(jnp.float32)
    if preds_S.shape[1] != Ct:
        x = (jnp.einsum("nchw,oc->nohw", x, params["align_w"])
             + params["align_b"][None, :, None, None])
    g = x + noise

    def conv(z, w, b):
        y = jax.lax.conv_general_dilated(
            z, w, (1, 1), "SAME",
            dimension_numbers=("NCHW", "OIHW", "NCHW"),
            precision=jax.lax.Precision.HIGHEST)
        return y + b[None, :, None, None]

    h = jax.nn.relu(conv(g, params["gen1_w"], params["gen1_b"]))
    new = conv(h, params["gen2_w"], params["gen2_b"])

    s = (new / temp_gdd).reshape(N, Ct, -1)
    t = (preds_T.astype(jnp.float32) / temp_gdd).reshape(N, Ct, -1)
    log_ps = jax.nn.log_softmax(s, axis=-1)
    pt = jax.nn.softmax(t, axis=-1)
    log_pt = jax.nn.log_softmax(t, axis=-1)
    kl = jnp.sum(pt * (log_pt - log_ps))
    return kl / (N * Ct) * (temp_gdd ** 2) * alpha_gdd


if __name__ == "__main__":
    key = jax.random.PRNGKey(0)
    ks = jax.random.split(key, 9)

    N, Cs, Ct, H, W = 2, 6, 4, 16, 16          # student 6ch -> align -> teacher 4ch
    alpha_gdd, temp_gdd = 145.0, 4.0

    preds_S = jax.random.normal(ks[0], (N, Cs, H, W), jnp.float32)
    preds_T = jax.random.normal(ks[1], (N, Ct, H, W), jnp.float32)

    # Deterministic parameter init (shapes from the module's __init__).
    params = dict(
        align_w=0.2 * jax.random.normal(ks[2], (Ct, Cs), jnp.float32),
        align_b=0.05 * jax.random.normal(ks[3], (Ct,), jnp.float32),
        gen1_w=0.2 * jax.random.normal(ks[4], (Ct, Ct, 3, 3), jnp.float32),
        gen1_b=0.05 * jax.random.normal(ks[5], (Ct,), jnp.float32),
        gen2_w=0.2 * jax.random.normal(ks[6], (Ct, Ct, 3, 3), jnp.float32),
        gen2_b=0.05 * jax.random.normal(ks[7], (Ct,), jnp.float32),
    )

    # torch.normal(mean=0, std=1, size=(N,1,H,W)) -> jax.random.normal (deterministic here).
    noise = jax.random.normal(ks[8], (N, 1, H, W), jnp.float32)

    loss = feature_loss(preds_S, preds_T, params, noise,
                        alpha_gdd=alpha_gdd, temp_gdd=temp_gdd)
    loss = jax.block_until_ready(loss)

    loss_ref = feature_loss_ref(preds_S, preds_T, params, noise,
                                alpha_gdd=alpha_gdd, temp_gdd=temp_gdd)
    np.testing.assert_allclose(np.asarray(loss), np.asarray(loss_ref),
                               rtol=2e-3, atol=1e-3)
    print("KERNEL_OK")
</pallas_src>

<mosaic_0001>
module attributes {stable_mosaic.version = 11 : i64} {
  func.func @kernel(%arg0: i32, %arg1: memref<16x16xbf16, #tpu.memory_space<vmem>>, %arg2: memref<16x1xf32, #tpu.memory_space<vmem>>, %arg3: memref<16x144xbf16, #tpu.memory_space<vmem>>, %arg4: memref<16x1xf32, #tpu.memory_space<vmem>>, %arg5: memref<16x144xbf16, #tpu.memory_space<vmem>>, %arg6: memref<16x1xf32, #tpu.memory_space<vmem>>, %arg7: memref<9x256xf32, #tpu.memory_space<vmem>>, %arg8: memref<16x256xbf16, #tpu.memory_space<vmem>>, %arg9: memref<16x256xf32, #tpu.memory_space<vmem>>, %arg10: memref<16x256xf32, #tpu.memory_space<vmem>>, %arg11: memref<1x1xf32, #tpu.memory_space<vmem>>) attributes {dimension_semantics = [#tpu.dimension_semantics<arbitrary>], iteration_bounds = array<i64: 1>, scalar_prefetch = 0 : i64, scratch_operands = 0 : i64, tpu.core_type = #tpu.core_type<tc>, window_params = [{pipeline_mode = #tpu.pipeline_mode<synchronous>, transform_indices = @transform_0, window_bounds = array<i64: 16, 16>}, {pipeline_mode = #tpu.pipeline_mode<synchronous>, transform_indices = @transform_1, window_bounds = array<i64: 16, 1>}, {pipeline_mode = #tpu.pipeline_mode<synchronous>, transform_indices = @transform_2, window_bounds = array<i64: 16, 144>}, {pipeline_mode = #tpu.pipeline_mode<synchronous>, transform_indices = @transform_3, window_bounds = array<i64: 16, 1>}, {pipeline_mode = #tpu.pipeline_mode<synchronous>, transform_indices = @transform_4, window_bounds = array<i64: 16, 144>}, {pipeline_mode = #tpu.pipeline_mode<synchronous>, transform_indices = @transform_5, window_bounds = array<i64: 16, 1>}, {pipeline_mode = #tpu.pipeline_mode<synchronous>, transform_indices = @transform_6, window_bounds = array<i64: 9, 256>}, {pipeline_mode = #tpu.pipeline_mode<synchronous>, transform_indices = @transform_7, window_bounds = array<i64: 16, 256>}, {pipeline_mode = #tpu.pipeline_mode<synchronous>, transform_indices = @transform_8, window_bounds = array<i64: 16, 256>}, {pipeline_mode = #tpu.pipeline_mode<synchronous>, transform_indices = @transform_9, window_bounds = array<i64: 16, 256>}, {pipeline_mode = #tpu.pipeline_mode<synchronous>, transform_indices = @transform_10, window_bounds = array<i64: 1, 1>}]} {
    %c0 = arith.constant 0 : index
    %c0_0 = arith.constant 0 : index
    %0 = vector.load %arg9[%c0, %c0_0] : memref<16x256xf32, #tpu.memory_space<vmem>>, vector<16x256xf32>
    %c0_1 = arith.constant 0 : index
    %c0_2 = arith.constant 0 : index
    %1 = vector.load %arg10[%c0_1, %c0_2] : memref<16x256xf32, #tpu.memory_space<vmem>>, vector<16x256xf32>
    %c0_3 = arith.constant 0 : index
    %c0_4 = arith.constant 0 : index
    %2 = vector.load %arg1[%c0_3, %c0_4] : memref<16x16xbf16, #tpu.memory_space<vmem>>, vector<16x16xbf16>
    %c0_5 = arith.constant 0 : index
    %c0_6 = arith.constant 0 : index
    %3 = vector.load %arg8[%c0_5, %c0_6] : memref<16x256xbf16, #tpu.memory_space<vmem>>, vector<16x256xbf16>
    %cst = arith.constant dense<0.000000e+00> : vector<16x256xf32>
    %4 = tpu.matmul %2, %3, %cst {dimension_numbers = #tpu.dot_dimension_numbers<[1], [0], [0], [1], [0, 0, 1, 1], [], []>} : vector<16x16xbf16>, vector<16x256xbf16>, vector<16x256xf32> -> vector<16x256xf32>
    %c0_7 = arith.constant 0 : index
    %c0_8 = arith.constant 0 : index
    %5 = vector.load %arg2[%c0_7, %c0_8] : memref<16x1xf32, #tpu.memory_space<vmem>>, vector<16x1xf32>
    %6 = vector.broadcast %5 : vector<16x1xf32> to vector<16x256xf32>
    %7 = arith.addf %4, %6 : vector<16x256xf32>
    %8 = arith.addf %7, %1 : vector<16x256xf32>
    %c0_9 = arith.constant 0 : index
    %c0_10 = arith.constant 0 : index
    %9 = vector.load %arg7[%c0_9, %c0_10] : memref<9x256xf32, #tpu.memory_space<vmem>>, vector<1x256xf32>
    %c17_i32 = arith.constant 17 : i32
    %10 = tpu.dynamic_rotate %8 by %c17_i32 dim 1 : vector<16x256xf32>, i32 -> vector<16x256xf32>
    %11 = vector.broadcast %9 : vector<1x256xf32> to vector<16x256xf32>
    %12 = arith.mulf %10, %11 : vector<16x256xf32>
    %c1 = arith.constant 1 : index
    %c0_11 = arith.constant 0 : index
    %13 = vector.load %arg7[%c1, %c0_11] : memref<9x256xf32, #tpu.memory_space<vmem>>, vector<1x256xf32>
    %c16_i32 = arith.constant 16 : i32
    %14 = tpu.dynamic_rotate %8 by %c16_i32 dim 1 : vector<16x256xf32>, i32 -> vector<16x256xf32>
    %15 = vector.broadcast %13 : vector<1x256xf32> to vector<16x256xf32>
    %16 = arith.mulf %14, %15 : vector<16x256xf32>
    %c2 = arith.constant 2 : index
    %c0_12 = arith.constant 0 : index
    %17 = vector.load %arg7[%c2, %c0_12] : memref<9x256xf32, #tpu.memory_space<vmem>>, vector<1x256xf32>
    %c15_i32 = arith.constant 15 : i32
    %18 = tpu.dynamic_rotate %8 by %c15_i32 dim 1 : vector<16x256xf32>, i32 -> vector<16x256xf32>
    %19 = vector.broadcast %17 : vector<1x256xf32> to vector<16x256xf32>
    %20 = arith.mulf %18, %19 : vector<16x256xf32>
    %c3 = arith.constant 3 : index
    %c0_13 = arith.constant 0 : index
    %21 = vector.load %arg7[%c3, %c0_13] : memref<9x256xf32, #tpu.memory_space<vmem>>, vector<1x256xf32>
    %c1_i32 = arith.constant 1 : i32
    %22 = tpu.dynamic_rotate %8 by %c1_i32 dim 1 : vector<16x256xf32>, i32 -> vector<16x256xf32>
    %23 = vector.broadcast %21 : vector<1x256xf32> to vector<16x256xf32>
    %24 = arith.mulf %22, %23 : vector<16x256xf32>
    %c4 = arith.constant 4 : index
    %c0_14 = arith.constant 0 : index
    %25 = vector.load %arg7[%c4, %c0_14] : memref<9x256xf32, #tpu.memory_space<vmem>>, vector<1x256xf32>
    %26 = vector.broadcast %25 : vector<1x256xf32> to vector<16x256xf32>
    %27 = arith.mulf %8, %26 : vector<16x256xf32>
    %c5 = arith.constant 5 : index
    %c0_15 = arith.constant 0 : index
    %28 = vector.load %arg7[%c5, %c0_15] : memref<9x256xf32, #tpu.memory_space<vmem>>, vector<1x256xf32>
    %c255_i32 = arith.constant 255 : i32
    %29 = tpu.dynamic_rotate %8 by %c255_i32 dim 1 : vector<16x256xf32>, i32 -> vector<16x256xf32>
    %30 = vector.broadcast %28 : vector<1x256xf32> to vector<16x256xf32>
    %31 = arith.mulf %29, %30 : vector<16x256xf32>
    %c6 = arith.constant 6 : index
    %c0_16 = arith.constant 0 : index
    %32 = vector.load %arg7[%c6, %c0_16] : memref<9x256xf32, #tpu.memory_space<vmem>>, vector<1x256xf32>
    %c241_i32 = arith.constant 241 : i32
    %33 = tpu.dynamic_rotate %8 by %c241_i32 dim 1 : vector<16x256xf32>, i32 -> vector<16x256xf32>
    %34 = vector.broadcast %32 : vector<1x256xf32> to vector<16x256xf32>
    %35 = arith.mulf %33, %34 : vector<16x256xf32>
    %c7 = arith.constant 7 : index
    %c0_17 = arith.constant 0 : index
    %36 = vector.load %arg7[%c7, %c0_17] : memref<9x256xf32, #tpu.memory_space<vmem>>, vector<1x256xf32>
    %c240_i32 = arith.constant 240 : i32
    %37 = tpu.dynamic_rotate %8 by %c240_i32 dim 1 : vector<16x256xf32>, i32 -> vector<16x256xf32>
    %38 = vector.broadcast %36 : vector<1x256xf32> to vector<16x256xf32>
    %39 = arith.mulf %37, %38 : vector<16x256xf32>
    %c8 = arith.constant 8 : index
    %c0_18 = arith.constant 0 : index
    %40 = vector.load %arg7[%c8, %c0_18] : memref<9x256xf32, #tpu.memory_space<vmem>>, vector<1x256xf32>
    %c239_i32 = arith.constant 239 : i32
    %41 = tpu.dynamic_rotate %8 by %c239_i32 dim 1 : vector<16x256xf32>, i32 -> vector<16x256xf32>
    %42 = vector.broadcast %40 : vector<1x256xf32> to vector<16x256xf32>
    %43 = arith.mulf %41, %42 : vector<16x256xf32>
    %44 = tpu.concatenate %12, %16, %20, %24, %27, %31, %35, %39, %43 in 0 : vector<16x256xf32>, vector<16x256xf32>, vector<16x256xf32>, vector<16x256xf32>, vector<16x256xf32>, vector<16x256xf32>, vector<16x256xf32>, vector<16x256xf32>, vector<16x256xf32> -> vector<144x256xf32>
    %45 = arith.truncf %44 : vector<144x256xf32> to vector<144x256xbf16>
    %c0_19 = arith.constant 0 : index
    %c0_20 = arith.constant 0 : index
    %46 = vector.load %arg3[%c0_19, %c0_20] : memref<16x144xbf16, #tpu.memory_space<vmem>>, vector<16x144xbf16>
    %cst_21 = arith.constant dense<0.000000e+00> : vector<16x256xf32>
    %47 = tpu.matmul %46, %45, %cst_21 {dimension_numbers = #tpu.dot_dimension_numbers<[1], [0], [0], [1], [0, 0, 1, 1], [], []>} : vector<16x144xbf16>, vector<144x256xbf16>, vector<16x256xf32> -> vector<16x256xf32>
    %c0_22 = arith.constant 0 : index
    %c0_23 = arith.constant 0 : index
    %48 = vector.load %arg4[%c0_22, %c0_23] : memref<16x1xf32, #tpu.memory_space<vmem>>, vector<16x1xf32>
    %49 = vector.broadcast %48 : vector<16x1xf32> to vector<16x256xf32>
    %50 = arith.addf %47, %49 : vector<16x256xf32>
    %cst_24 = arith.constant 0.000000e+00 : f32
    %51 = vector.broadcast %cst_24 : f32 to vector<16x256xf32>
    %52 = arith.maximumf %50, %51 : vector<16x256xf32>
    %c0_25 = arith.constant 0 : index
    %c0_26 = arith.constant 0 : index
    %53 = vector.load %arg7[%c0_25, %c0_26] : memref<9x256xf32, #tpu.memory_space<vmem>>, vector<1x256xf32>
    %c17_i32_27 = arith.constant 17 : i32
    %54 = tpu.dynamic_rotate %52 by %c17_i32_27 dim 1 : vector<16x256xf32>, i32 -> vector<16x256xf32>
    %55 = vector.broadcast %53 : vector<1x256xf32> to vector<16x256xf32>
    %56 = arith.mulf %54, %55 : vector<16x256xf32>
    %c1_28 = arith.constant 1 : index
    %c0_29 = arith.constant 0 : index
    %57 = vector.load %arg7[%c1_28, %c0_29] : memref<9x256xf32, #tpu.memory_space<vmem>>, vector<1x256xf32>
    %c16_i32_30 = arith.constant 16 : i32
    %58 = tpu.dynamic_rotate %52 by %c16_i32_30 dim 1 : vector<16x256xf32>, i32 -> vector<16x256xf32>
    %59 = vector.broadcast %57 : vector<1x256xf32> to vector<16x256xf32>
    %60 = arith.mulf %58, %59 : vector<16x256xf32>
    %c2_31 = arith.constant 2 : index
    %c0_32 = arith.constant 0 : index
    %61 = vector.load %arg7[%c2_31, %c0_32] : memref<9x256xf32, #tpu.memory_space<vmem>>, vector<1x256xf32>
    %c15_i32_33 = arith.constant 15 : i32
    %62 = tpu.dynamic_rotate %52 by %c15_i32_33 dim 1 : vector<16x256xf32>, i32 -> vector<16x256xf32>
    %63 = vector.broadcast %61 : vector<1x256xf32> to vector<16x256xf32>
    %64 = arith.mulf %62, %63 : vector<16x256xf32>
    %c3_34 = arith.constant 3 : index
    %c0_35 = arith.constant 0 : index
    %65 = vector.load %arg7[%c3_34, %c0_35] : memref<9x256xf32, #tpu.memory_space<vmem>>, vector<1x256xf32>
    %c1_i32_36 = arith.constant 1 : i32
    %66 = tpu.dynamic_rotate %52 by %c1_i32_36 dim 1 : vector<16x256xf32>, i32 -> vector<16x256xf32>
    %67 = vector.broadcast %65 : vector<1x256xf32> to vector<16x256xf32>
    %68 = arith.mulf %66, %67 : vector<16x256xf32>
    %c4_37 = arith.constant 4 : index
    %c0_38 = arith.constant 0 : index
    %69 = vector.load %arg7[%c4_37, %c0_38] : memref<9x256xf32, #tpu.memory_space<vmem>>, vector<1x256xf32>
    %70 = vector.broadcast %69 : vector<1x256xf32> to vector<16x256xf32>
    %71 = arith.mulf %52, %70 : vector<16x256xf32>
    %c5_39 = arith.constant 5 : index
    %c0_40 = arith.constant 0 : index
    %72 = vector.load %arg7[%c5_39, %c0_40] : memref<9x256xf32, #tpu.memory_space<vmem>>, vector<1x256xf32>
    %c255_i32_41 = arith.constant 255 : i32
    %73 = tpu.dynamic_rotate %52 by %c255_i32_41 dim 1 : vector<16x256xf32>, i32 -> vector<16x256xf32>
    %74 = vector.broadcast %72 : vector<1x256xf32> to vector<16x256xf32>
    %75 = arith.mulf %73, %74 : vector<16x256xf32>
    %c6_42 = arith.constant 6 : index
    %c0_43 = arith.constant 0 : index
    %76 = vector.load %arg7[%c6_42, %c0_43] : memref<9x256xf32, #tpu.memory_space<vmem>>, vector<1x256xf32>
    %c241_i32_44 = arith.constant 241 : i32
    %77 = tpu.dynamic_rotate %52 by %c241_i32_44 dim 1 : vector<16x256xf32>, i32 -> vector<16x256xf32>
    %78 = vector.broadcast %76 : vector<1x256xf32> to vector<16x256xf32>
    %79 = arith.mulf %77, %78 : vector<16x256xf32>
    %c7_45 = arith.constant 7 : index
    %c0_46 = arith.constant 0 : index
    %80 = vector.load %arg7[%c7_45, %c0_46] : memref<9x256xf32, #tpu.memory_space<vmem>>, vector<1x256xf32>
    %c240_i32_47 = arith.constant 240 : i32
    %81 = tpu.dynamic_rotate %52 by %c240_i32_47 dim 1 : vector<16x256xf32>, i32 -> vector<16x256xf32>
    %82 = vector.broadcast %80 : vector<1x256xf32> to vector<16x256xf32>
    %83 = arith.mulf %81, %82 : vector<16x256xf32>
    %c8_48 = arith.constant 8 : index
    %c0_49 = arith.constant 0 : index
    %84 = vector.load %arg7[%c8_48, %c0_49] : memref<9x256xf32, #tpu.memory_space<vmem>>, vector<1x256xf32>
    %c239_i32_50 = arith.constant 239 : i32
    %85 = tpu.dynamic_rotate %52 by %c239_i32_50 dim 1 : vector<16x256xf32>, i32 -> vector<16x256xf32>
    %86 = vector.broadcast %84 : vector<1x256xf32> to vector<16x256xf32>
    %87 = arith.mulf %85, %86 : vector<16x256xf32>
    %88 = tpu.concatenate %56, %60, %64, %68, %71, %75, %79, %83, %87 in 0 : vector<16x256xf32>, vector<16x256xf32>, vector<16x256xf32>, vector<16x256xf32>, vector<16x256xf32>, vector<16x256xf32>, vector<16x256xf32>, vector<16x256xf32>, vector<16x256xf32> -> vector<144x256xf32>
    %89 = arith.truncf %88 : vector<144x256xf32> to vector<144x256xbf16>
    %c0_51 = arith.constant 0 : index
    %c0_52 = arith.constant 0 : index
    %90 = vector.load %arg5[%c0_51, %c0_52] : memref<16x144xbf16, #tpu.memory_space<vmem>>, vector<16x144xbf16>
    %cst_53 = arith.constant dense<0.000000e+00> : vector<16x256xf32>
    %91 = tpu.matmul %90, %89, %cst_53 {dimension_numbers = #tpu.dot_dimension_numbers<[1], [0], [0], [1], [0, 0, 1, 1], [], []>} : vector<16x144xbf16>, vector<144x256xbf16>, vector<16x256xf32> -> vector<16x256xf32>
    %c0_54 = arith.constant 0 : index
    %c0_55 = arith.constant 0 : index
    %92 = vector.load %arg6[%c0_54, %c0_55] : memref<16x1xf32, #tpu.memory_space<vmem>>, vector<16x1xf32>
    %93 = vector.broadcast %92 : vector<16x1xf32> to vector<16x256xf32>
    %94 = arith.addf %91, %93 : vector<16x256xf32>
    %cst_56 = arith.constant 2.500000e-01 : f32
    %95 = vector.broadcast %cst_56 : f32 to vector<16x256xf32>
    %96 = arith.mulf %94, %95 : vector<16x256xf32>
    %cst_57 = arith.constant 2.500000e-01 : f32
    %97 = vector.broadcast %cst_57 : f32 to vector<16x256xf32>
    %98 = arith.mulf %0, %97 : vector<16x256xf32>
    %cst_58 = arith.constant dense<0xFF800000> : vector<16xf32>
    %99 = vector.multi_reduction <maximumf>, %96, %cst_58 [1] : vector<16x256xf32> to vector<16xf32>
    %100 = vector.shape_cast %99 : vector<16xf32> to vector<16x1xf32>
    %101 = vector.broadcast %100 : vector<16x1xf32> to vector<16x256xf32>
    %102 = arith.subf %96, %101 : vector<16x256xf32>
    %103 = math.exp %102 : vector<16x256xf32>
    %cst_59 = arith.constant dense<0.000000e+00> : vector<16xf32>
    %104 = vector.multi_reduction <add>, %103, %cst_59 [1] : vector<16x256xf32> to vector<16xf32>
    %105 = vector.shape_cast %104 : vector<16xf32> to vector<16x1xf32>
    %cst_60 = arith.constant dense<0xFF800000> : vector<16xf32>
    %106 = vector.multi_reduction <maximumf>, %98, %cst_60 [1] : vector<16x256xf32> to vector<16xf32>
    %107 = vector.shape_cast %106 : vector<16xf32> to vector<16x1xf32>
    %108 = vector.broadcast %107 : vector<16x1xf32> to vector<16x256xf32>
    %109 = arith.subf %98, %108 : vector<16x256xf32>
    %110 = math.exp %109 : vector<16x256xf32>
    %cst_61 = arith.constant dense<0.000000e+00> : vector<16xf32>
    %111 = vector.multi_reduction <add>, %110, %cst_61 [1] : vector<16x256xf32> to vector<16xf32>
    %112 = vector.shape_cast %111 : vector<16xf32> to vector<16x1xf32>
    %113 = arith.subf %98, %96 : vector<16x256xf32>
    %114 = arith.subf %107, %100 : vector<16x1xf32>
    %115 = vector.broadcast %114 : vector<16x1xf32> to vector<16x256xf32>
    %116 = arith.subf %113, %115 : vector<16x256xf32>
    %117 = math.log %112 : vector<16x1xf32>
    %118 = math.log %105 : vector<16x1xf32>
    %119 = arith.subf %117, %118 : vector<16x1xf32>
    %120 = vector.broadcast %119 : vector<16x1xf32> to vector<16x256xf32>
    %121 = arith.subf %116, %120 : vector<16x256xf32>
    %122 = arith.mulf %110, %121 : vector<16x256xf32>
    %cst_62 = arith.constant dense<0.000000e+00> : vector<16xf32>
    %123 = vector.multi_reduction <add>, %122, %cst_62 [1] : vector<16x256xf32> to vector<16xf32>
    %124 = vector.shape_cast %123 : vector<16xf32> to vector<16x1xf32>
    %125 = arith.divf %124, %112 : vector<16x1xf32>
    %cst_63 = arith.constant dense<0.000000e+00> : vector<1xf32>
    %126 = vector.multi_reduction <add>, %125, %cst_63 [0] : vector<16x1xf32> to vector<1xf32>
    %127 = vector.shape_cast %126 : vector<1xf32> to vector<1x1xf32>
    %cst_64 = arith.constant 2.900000e+02 : f32
    %128 = vector.broadcast %cst_64 : f32 to vector<1x1xf32>
    %129 = arith.mulf %127, %128 : vector<1x1xf32>
    %c0_65 = arith.constant 0 : index
    %c0_66 = arith.constant 0 : index
    %130 = vector.load %arg11[%c0_65, %c0_66] : memref<1x1xf32, #tpu.memory_space<vmem>>, vector<1x1xf32>
    tpu.vector_store %arg11[%c0_65, %c0_66], %129 {strides = array<i32>} : memref<1x1xf32, #tpu.memory_space<vmem>>, vector<1x1xf32>,
    return
  }
  func.func @transform_0(%arg0: i32) -> (i32, i32) {
    %c0_i32 = arith.constant 0 : i32
    %c0_i32_0 = arith.constant 0 : i32
    %c0_i32_1 = arith.constant 0 : i32
    return %c0_i32, %c0_i32_0 : i32, i32
  }
  func.func @transform_1(%arg0: i32) -> (i32, i32) {
    %c0_i32 = arith.constant 0 : i32
    %c0_i32_0 = arith.constant 0 : i32
    %c0_i32_1 = arith.constant 0 : i32
    return %c0_i32, %c0_i32_0 : i32, i32
  }
  func.func @transform_2(%arg0: i32) -> (i32, i32) {
    %c0_i32 = arith.constant 0 : i32
    %c0_i32_0 = arith.constant 0 : i32
    %c0_i32_1 = arith.constant 0 : i32
    return %c0_i32, %c0_i32_0 : i32, i32
  }
  func.func @transform_3(%arg0: i32) -> (i32, i32) {
    %c0_i32 = arith.constant 0 : i32
    %c0_i32_0 = arith.constant 0 : i32
    %c0_i32_1 = arith.constant 0 : i32
    return %c0_i32, %c0_i32_0 : i32, i32
  }
  func.func @transform_4(%arg0: i32) -> (i32, i32) {
    %c0_i32 = arith.constant 0 : i32
    %c0_i32_0 = arith.constant 0 : i32
    %c0_i32_1 = arith.constant 0 : i32
    return %c0_i32, %c0_i32_0 : i32, i32
  }
  func.func @transform_5(%arg0: i32) -> (i32, i32) {
    %c0_i32 = arith.constant 0 : i32
    %c0_i32_0 = arith.constant 0 : i32
    %c0_i32_1 = arith.constant 0 : i32
    return %c0_i32, %c0_i32_0 : i32, i32
  }
  func.func @transform_6(%arg0: i32) -> (i32, i32) {
    %c0_i32 = arith.constant 0 : i32
    %c0_i32_0 = arith.constant 0 : i32
    %c0_i32_1 = arith.constant 0 : i32
    return %c0_i32, %c0_i32_0 : i32, i32
  }
  func.func @transform_7(%arg0: i32) -> (i32, i32) {
    %c0_i32 = arith.constant 0 : i32
    %c0_i32_0 = arith.constant 0 : i32
    %c0_i32_1 = arith.constant 0 : i32
    return %c0_i32, %c0_i32_0 : i32, i32
  }
  func.func @transform_8(%arg0: i32) -> (i32, i32) {
    %c0_i32 = arith.constant 0 : i32
    %c0_i32_0 = arith.constant 0 : i32
    %c0_i32_1 = arith.constant 0 : i32
    return %c0_i32, %c0_i32_0 : i32, i32
  }
  func.func @transform_9(%arg0: i32) -> (i32, i32) {
    %c0_i32 = arith.constant 0 : i32
    %c0_i32_0 = arith.constant 0 : i32
    %c0_i32_1 = arith.constant 0 : i32
    return %c0_i32, %c0_i32_0 : i32, i32
  }
  func.func @transform_10(%arg0: i32) -> (i32, i32) {
    %c0_i32 = arith.constant 0 : i32
    %c0_i32_0 = arith.constant 0 : i32
    %c0_i32_1 = arith.constant 0 : i32
    return %c0_i32, %c0_i32_0 : i32, i32
  }
}

</mosaic_0001>

<llo_original>
// kernel: tpu_custom_call.1
$region0: #{tpu_custom_call.1}
  #allocation0 [shape = 'u32[]', space=smem, size = 0x4, offset = 0x4, fixed_abs, tag = 'smem constant byte address 0x4 - core index']
  #allocation1 [shape = 'u32[72,128]{1,0:T(1,128)}', space=vmem, size = 0x9000, scoped, tag = 'internal scratch']
  %s0 = inlined_call_operand.vmem [shape: bf16[16,16], index: 0, kind: input, shape index: {}]
  %s1 = inlined_call_operand.vmem [shape: f32[16,1], index: 1, kind: input, shape index: {}]
  %s2 = inlined_call_operand.vmem [shape: bf16[16,144], index: 2, kind: input, shape index: {}]
  %s3 = inlined_call_operand.vmem [shape: f32[16,1], index: 3, kind: input, shape index: {}]
  %s4 = inlined_call_operand.hbm [shape: bf16[16,144], index: 4, kind: input, shape index: {}]
  %s5 = inlined_call_operand.vmem [shape: f32[16,1], index: 5, kind: input, shape index: {}]
  %s6 = inlined_call_operand.vmem [shape: f32[9,256], index: 6, kind: input, shape index: {}]
  %s7 = inlined_call_operand.hbm [shape: bf16[16,256], index: 7, kind: input, shape index: {}]
  %s8 = inlined_call_operand.hbm [shape: f32[16,256], index: 8, kind: input, shape index: {}]
  %s9 = inlined_call_operand.hbm [shape: f32[16,256], index: 9, kind: input, shape index: {}]
  %s10 = inlined_call_operand.hbm [shape: f32[1,1], index: 10, kind: output, shape index: {}]
  %s11 = sld [smem:[#allocation0]]
  $region66: #{tpu_custom_call.1} parent=0
    _
  %s13 = ssub.s32 1, %s11
  %s14 = scalar_select 0, %s13, %s11
  $region1: #{tpu_custom_call.1} parent=0
    #allocation2 [shape = 'u8[8192]{0}', space=vmem, size = 0x2000, scoped, tag = 'input window, operand 4, single buffered']
    #allocation3 [shape = 's32[1]{0}', space=sflag, size = 0x4, scoped, tag = 'scoped memory for tpu_custom_call.1']
    #allocation4 [shape = 's32[1]{0}', space=sflag, size = 0x4, scoped, tag = 'scoped memory for tpu_custom_call.1']
    #allocation5 [shape = 'u8[8192]{0}', space=vmem, size = 0x2000, scoped, tag = 'input window, operand 7, single buffered']
    #allocation6 [shape = 's32[1]{0}', space=sflag, size = 0x4, scoped, tag = 'scoped memory for tpu_custom_call.1']
    #allocation7 [shape = 'u8[16384]{0}', space=vmem, size = 0x4000, scoped, tag = 'input window, operand 8, single buffered']
    #allocation8 [shape = 'u8[16384]{0}', space=vmem, size = 0x4000, scoped, tag = 'input window, operand 9, single buffered']
    #allocation9 [shape = 's32[1]{0}', space=sflag, size = 0x4, scoped, tag = 'scoped memory for tpu_custom_call.1']
    #allocation10 [shape = 'u8[512]{0}', space=vmem, size = 0x400, scoped, tag = 'output window, operand 0, single buffered']
    %15 = vsyncpa [#allocation3], 0
    %16 = vsyncpa [#allocation6], 0
    %17 = vsyncpa [#allocation9], 0
    %18 = vsyncpa [#allocation4], 0
    // Predicated region
    $region2: #{tpu_custom_call.1} parent=1 // pred_check
      _
    $region3: #{tpu_custom_call.1} parent=1 // pred_check_branch
      %20 = sbr.rel (0) target = $region5
    $region4: #{tpu_custom_call.1} parent=1 // pred_region
      _
    $region5: #{tpu_custom_call.1} parent=1 // pred_fallthru
      _
    // Predicated region
    $region6: #{tpu_custom_call.1} parent=1 // pred_check
      _
    $region7: #{tpu_custom_call.1} parent=1 // pred_check_branch
      %22 = sbr.rel (0) target = $region9
    $region8: #{tpu_custom_call.1} parent=1 // pred_region
      _
    $region9: #{tpu_custom_call.1} parent=1 // pred_fallthru
      _
    // Predicated region
    $region10: #{tpu_custom_call.1} parent=1 // pred_check
      _
    $region11: #{tpu_custom_call.1} parent=1 // pred_check_branch
      %24 = sbr.rel (0) target = $region13
    $region12: #{tpu_custom_call.1} parent=1 // pred_region
      _
    $region13: #{tpu_custom_call.1} parent=1 // pred_fallthru
      _
    // Predicated region
    $region14: #{tpu_custom_call.1} parent=1 // pred_check
      _
    $region15: #{tpu_custom_call.1} parent=1 // pred_check_branch
      %26 = sbr.rel (0) target = $region17
    $region16: #{tpu_custom_call.1} parent=1 // pred_region
      _
    $region17: #{tpu_custom_call.1} parent=1 // pred_fallthru
      _
    // Predicated region
    $region18: #{tpu_custom_call.1} parent=1 // pred_check
      _
    $region19: #{tpu_custom_call.1} parent=1 // pred_check_branch
      %28 = sbr.rel (0) target = $region21
    $region20: #{tpu_custom_call.1} parent=1 // pred_region
      %30 = vsyncadd [#allocation3], 0
      %s31 = sshll.u32 %s4, 4
      %s32 = int_to_ptr.hbm [resolvable:$true] %s31
      %s33 = sshll.u32 [#allocation2], 4
      %s34 = int_to_ptr.vmem [resolvable:$true] %s33
      %39 = dma.hbm_to_vmem [thread:$0]  %s32, 256, %s34, [#allocation3], 128, 128, 8
    $region21: #{tpu_custom_call.1} parent=1 // pred_fallthru
      _
    // Predicated region
    $region22: #{tpu_custom_call.1} parent=1 // pred_check
      _
    $region23: #{tpu_custom_call.1} parent=1 // pred_check_branch
      %41 = sbr.rel (0) target = $region25
    $region24: #{tpu_custom_call.1} parent=1 // pred_region
      _
    $region25: #{tpu_custom_call.1} parent=1 // pred_fallthru
      _
    // Predicated region
    $region26: #{tpu_custom_call.1} parent=1 // pred_check
      _
    $region27: #{tpu_custom_call.1} parent=1 // pred_check_branch
      %43 = sbr.rel (0) target = $region29
    $region28: #{tpu_custom_call.1} parent=1 // pred_region
      _
    $region29: #{tpu_custom_call.1} parent=1 // pred_fallthru
      _
    // Predicated region
    $region30: #{tpu_custom_call.1} parent=1 // pred_check
      _
    $region31: #{tpu_custom_call.1} parent=1 // pred_check_branch
      %45 = sbr.rel (0) target = $region33
    $region32: #{tpu_custom_call.1} parent=1 // pred_region
      %47 = vsyncadd [#allocation6], 0
      %s48 = sshll.u32 %s7, 4
      %s49 = int_to_ptr.hbm [resolvable:$true] %s48
      %s50 = sshll.u32 [#allocation5], 4
      %s51 = int_to_ptr.vmem [resolvable:$true] %s50
      %56 = dma.hbm_to_vmem [thread:$0]  %s49, 256, %s51, [#allocation6], 128, 128, 8
    $region33: #{tpu_custom_call.1} parent=1 // pred_fallthru
      _
    // Predicated region
    $region34: #{tpu_custom_call.1} parent=1 // pred_check
      _
    $region35: #{tpu_custom_call.1} parent=1 // pred_check_branch
      %58 = sbr.rel (0) target = $region37
    $region36: #{tpu_custom_call.1} parent=1 // pred_region
      %60 = vsyncadd [#allocation6], 0
      %s61 = sshll.u32 %s8, 4
      %s62 = int_to_ptr.hbm [resolvable:$true] %s61
      %s63 = sshll.u32 [#allocation7], 4
      %s64 = int_to_ptr.vmem [resolvable:$true] %s63
      %69 = dma.hbm_to_vmem [thread:$0]  %s62, 512, %s64, [#allocation6], 256, 256, 16
    $region37: #{tpu_custom_call.1} parent=1 // pred_fallthru
      _
    // Predicated region
    $region38: #{tpu_custom_call.1} parent=1 // pred_check
      _
    $region39: #{tpu_custom_call.1} parent=1 // pred_check_branch
      %71 = sbr.rel (0) target = $region41
    $region40: #{tpu_custom_call.1} parent=1 // pred_region
      %73 = vsyncadd [#allocation9], 0
      %s74 = sshll.u32 %s9, 4
      %s75 = int_to_ptr.hbm [resolvable:$true] %s74
      %s76 = sshll.u32 [#allocation8], 4
      %s77 = int_to_ptr.vmem [resolvable:$true] %s76
      %82 = dma.hbm_to_vmem [thread:$0]  %s75, 512, %s77, [#allocation9], 256, 256, 16
    $region41: #{tpu_custom_call.1} parent=1 // pred_fallthru
      _
    // Predicated region
    $region42: #{tpu_custom_call.1} parent=1 // pred_check
      _
    $region43: #{tpu_custom_call.1} parent=1 // pred_check_branch
      %84 = sbr.rel (0) target = $region45
    $region44: #{tpu_custom_call.1} parent=1 // pred_region
      %86 = dma.done [#allocation3], 256
    $region45: #{tpu_custom_call.1} parent=1 // pred_fallthru
      _
    // Predicated region
    $region46: #{tpu_custom_call.1} parent=1 // pred_check
      _
    $region47: #{tpu_custom_call.1} parent=1 // pred_check_branch
      %88 = sbr.rel (0) target = $region49
    $region48: #{tpu_custom_call.1} parent=1 // pred_region
      %90 = dma.done [#allocation6], 256
    $region49: #{tpu_custom_call.1} parent=1 // pred_fallthru
      _
    // Predicated region
    $region50: #{tpu_custom_call.1} parent=1 // pred_check
      _
    $region51: #{tpu_custom_call.1} parent=1 // pred_check_branch
      %92 = sbr.rel (0) target = $region53
    $region52: #{tpu_custom_call.1} parent=1 // pred_region
      %94 = dma.done [#allocation6], 512
    $region53: #{tpu_custom_call.1} parent=1 // pred_fallthru
      _
    // Predicated region
    $region54: #{tpu_custom_call.1} parent=1 // pred_check
      _
    $region55: #{tpu_custom_call.1} parent=1 // pred_check_branch
      %96 = sbr.rel (0) target = $region57
    $region56: #{tpu_custom_call.1} parent=1 // pred_region
      %98 = dma.done [#allocation9], 512
    $region57: #{tpu_custom_call.1} parent=1 // pred_fallthru
      _
    %v100 = vld [vmem:[#allocation7] sm:$0xff]
    %v101 = vld [vmem:[#allocation7 + $0x8] sm:$0xff]
    %v102 = vld [vmem:[#allocation7 + $0x10] sm:$0xff]
    %v103 = vld [vmem:[#allocation7 + $0x18] sm:$0xff]
    %v104 = vld [vmem:[#allocation8] sm:$0xff]
    %v105 = vld [vmem:[#allocation8 + $0x8] sm:$0xff]
    %v106 = vld [vmem:[#allocation8 + $0x10] sm:$0xff]
    %v107 = vld [vmem:[#allocation8 + $0x18] sm:$0xff]
    %v108 = vld [vmem:[%s0] sm:$0xf]
    %v109 = vld [vmem:[%s0 + $0x4] sm:$0xf]
    %v110 = vld [vmem:[#allocation5] sm:$0xff]
    %v111 = vld [vmem:[#allocation5 + $0x8] sm:$0xff]
    %v112 = vld [vmem:[%s1] sm:$0xff]
    %v113 = vld [vmem:[%s1 + $0x8] sm:$0xff]
    %115 = vset.pattern.permute.xlu0 0
    %116 = vperm.xlu0 %115, %v112
    %v117 = vpop.permute.xlu0 %116
    %120 = vset.pattern.permute.xlu0 0
    %121 = vperm.xlu0 %120, %v113
    %v122 = vpop.permute.xlu0 %121
    %v126 = vunpack.c.l.b16 %v108
    %v127 = vunpack.c.l.b16 %v109
    %v128 = vpack.c.b16 %v127, %v126
    %v131 = vunpack.c.l.b16 %v110
    %v132 = vunpack.c.h.b16 %v110
    %v133 = vunpack.c.l.b16 %v111
    %v134 = vunpack.c.h.b16 %v111
    %v135 = vpack.c.b16 %v133, %v131
    %v136 = vpack.c.b16 %v134, %v132
    %vm139 = vcmask 130048
    %v141 = vsel %vm139, %v128, 0
    %143 = vmatpush.bf16.msra.mxu0 0
    %144 = vmatpush.bf16.msra.mxu0 0
    %145 = vmatpush.bf16.msra.mxu0 0
    %146 = vmatpush.bf16.msra.mxu0 0
    %147 = vmatpush.bf16.msra.mxu0 0
    %148 = vmatpush.bf16.msra.mxu0 0
    %149 = vmatpush.bf16.msra.mxu0 0
    %150 = vmatpush.bf16.msra.mxu0 %v135
    %151 = vmatmul.bf16.gmra.mxu0 %v141
    %v152 = vpop.f32.mrf.mxu0
    %v153 = vadd.f32 %v117, %v152
    %v154 = vpop.f32.mrf.mxu0
    %v155 = vadd.f32 %v122, %v154
    %156 = vdwg.mxu0
    %157 = vmatpush.bf16.msra.mxu0 0
    %158 = vmatpush.bf16.msra.mxu0 0
    %159 = vmatpush.bf16.msra.mxu0 0
    %160 = vmatpush.bf16.msra.mxu0 0
    %161 = vmatpush.bf16.msra.mxu0 0
    %162 = vmatpush.bf16.msra.mxu0 0
    %163 = vmatpush.bf16.msra.mxu0 0
    %164 = vmatpush.bf16.msra.mxu0 %v136
    %165 = vmatmul.bf16.gmra.mxu0 %v141
    %v166 = vpop.f32.mrf.mxu0
    %v167 = vadd.f32 %v117, %v166
    %v168 = vpop.f32.mrf.mxu0
    %v169 = vadd.f32 %v122, %v168
    %170 = vdwg.mxu0
    %v171 = vadd.f32 %v153, %v104
    %v172 = vadd.f32 %v167, %v105
    %v173 = vadd.f32 %v155, %v106
    %v174 = vadd.f32 %v169, %v107
    %v175 = vld [vmem:[%s6] ss:$8 sm:$0x3]
    %176 = vrot.lane.b32.xlu0 %v171, 17
    %v177 = vpop.permute.xlu0 %176
    %178 = vrot.lane.b32.xlu0 %v173, 17
    %v179 = vpop.permute.xlu0 %178
    %180 = vrot.lane.b32.xlu0 %v172, 17
    %v181 = vpop.permute.xlu0 %180
    %182 = vrot.lane.b32.xlu0 %v174, 17
    %v183 = vpop.permute.xlu0 %182
    %v184 = vlaneseq
    %v185 = vand.u32 %v184, 127
    %vm186 = vcmp.lt.s32.totalorder %v185, 17
    %v187 = vsel %vm186, %v177, %v181
    %v188 = vsel %vm186, %v179, %v183
    %v189 = vsel %vm186, %v181, %v177
    %v190 = vsel %vm186, %v183, %v179
    %v192 = vperm.slane %v175, 0
    %v193 = vperm.slane %v175, 1
    %v196 = vmul.f32 %v189, %v192
    %v197 = vmul.f32 %v187, %v193
    %v198 = vmul.f32 %v190, %v192
    %v199 = vmul.f32 %v188, %v193
    %s200 = scalar_lea.vmem %s6, 1
    %v201 = vld [vmem:[%s200] ss:$8 sm:$0x3]
    %202 = vrot.lane.b32.xlu0 %v171, 16
    %v203 = vpop.permute.xlu0 %202
    %204 = vrot.lane.b32.xlu0 %v173, 16
    %v205 = vpop.permute.xlu0 %204
    %206 = vrot.lane.b32.xlu0 %v172, 16
    %v207 = vpop.permute.xlu0 %206
    %208 = vrot.lane.b32.xlu0 %v174, 16
    %v209 = vpop.permute.xlu0 %208
    %vm210 = vcmp.lt.s32.totalorder %v185, 16
    %v211 = vsel %vm210, %v203, %v207
    %v212 = vsel %vm210, %v205, %v209
    %v213 = vsel %vm210, %v207, %v203
    %v214 = vsel %vm210, %v209, %v205
    %v216 = vperm.slane %v201, 0
    %v217 = vperm.slane %v201, 1
    %v220 = vmul.f32 %v213, %v216
    %v221 = vmul.f32 %v211, %v217
    %v222 = vmul.f32 %v214, %v216
    %v223 = vmul.f32 %v212, %v217
    %s224 = scalar_lea.vmem %s6, 2
    %v225 = vld [vmem:[%s224] ss:$8 sm:$0x3]
    %226 = vrot.lane.b32.xlu0 %v171, 15
    %v227 = vpop.permute.xlu0 %226
    %228 = vrot.lane.b32.xlu0 %v173, 15
    %v229 = vpop.permute.xlu0 %228
    %230 = vrot.lane.b32.xlu0 %v172, 15
    %v231 = vpop.permute.xlu0 %230
    %232 = vrot.lane.b32.xlu0 %v174, 15
    %v233 = vpop.permute.xlu0 %232
    %vm234 = vcmp.lt.s32.totalorder %v185, 15
    %v235 = vsel %vm234, %v227, %v231
    %v236 = vsel %vm234, %v229, %v233
    %v237 = vsel %vm234, %v231, %v227
    %v238 = vsel %vm234, %v233, %v229
    %v240 = vperm.slane %v225, 0
    %v241 = vperm.slane %v225, 1
    %v244 = vmul.f32 %v237, %v240
    %v245 = vmul.f32 %v235, %v241
    %v246 = vmul.f32 %v238, %v240
    %v247 = vmul.f32 %v236, %v241
    %s248 = scalar_lea.vmem %s6, 3
    %v249 = vld [vmem:[%s248] ss:$8 sm:$0x3]
    %250 = vrot.lane.b32.xlu0 %v171, 1
    %v251 = vpop.permute.xlu0 %250
    %252 = vrot.lane.b32.xlu0 %v173, 1
    %v253 = vpop.permute.xlu0 %252
    %254 = vrot.lane.b32.xlu0 %v172, 1
    %v255 = vpop.permute.xlu0 %254
    %256 = vrot.lane.b32.xlu0 %v174, 1
    %v257 = vpop.permute.xlu0 %256
    %vm258 = vcmp.lt.s32.totalorder %v185, 1
    %v259 = vsel %vm258, %v251, %v255
    %v260 = vsel %vm258, %v253, %v257
    %v261 = vsel %vm258, %v255, %v251
    %v262 = vsel %vm258, %v257, %v253
    %v264 = vperm.slane %v249, 0
    %v265 = vperm.slane %v249, 1
    %v268 = vmul.f32 %v261, %v264
    %v269 = vmul.f32 %v259, %v265
    %v270 = vmul.f32 %v262, %v264
    %v271 = vmul.f32 %v260, %v265
    %s272 = scalar_lea.vmem %s6, 4
    %v273 = vld [vmem:[%s272] ss:$8 sm:$0x3]
    %v275 = vperm.slane %v273, 0
    %v276 = vperm.slane %v273, 1
    %v279 = vmul.f32 %v171, %v275
    %v280 = vmul.f32 %v172, %v276
    %v281 = vmul.f32 %v173, %v275
    %v282 = vmul.f32 %v174, %v276
    %s283 = scalar_lea.vmem %s6, 5
    %v284 = vld [vmem:[%s283] ss:$8 sm:$0x3]
    %285 = vrot.lane.b32.xlu0 %v171, 127
    %v286 = vpop.permute.xlu0 %285
    %287 = vrot.lane.b32.xlu0 %v173, 127
    %v288 = vpop.permute.xlu0 %287
    %289 = vrot.lane.b32.xlu0 %v172, 127
    %v290 = vpop.permute.xlu0 %289
    %291 = vrot.lane.b32.xlu0 %v174, 127
    %v292 = vpop.permute.xlu0 %291
    %vm293 = vcmp.lt.s32.totalorder %v185, 127
    %v294 = vsel %vm293, %v286, %v290
    %v295 = vsel %vm293, %v288, %v292
    %v296 = vsel %vm293, %v290, %v286
    %v297 = vsel %vm293, %v292, %v288
    %v299 = vperm.slane %v284, 0
    %v300 = vperm.slane %v284, 1
    %v303 = vmul.f32 %v294, %v299
    %v304 = vmul.f32 %v296, %v300
    %v305 = vmul.f32 %v295, %v299
    %v306 = vmul.f32 %v297, %v300
    %s307 = scalar_lea.vmem %s6, 6
    %v308 = vld [vmem:[%s307] ss:$8 sm:$0x3]
    %309 = vrot.lane.b32.xlu0 %v171, 113
    %v310 = vpop.permute.xlu0 %309
    %311 = vrot.lane.b32.xlu0 %v173, 113
    %v312 = vpop.permute.xlu0 %311
    %313 = vrot.lane.b32.xlu0 %v172, 113
    %v314 = vpop.permute.xlu0 %313
    %315 = vrot.lane.b32.xlu0 %v174, 113
    %v316 = vpop.permute.xlu0 %315
    %vm317 = vcmp.lt.s32.totalorder %v185, 113
    %v318 = vsel %vm317, %v310, %v314
    %v319 = vsel %vm317, %v312, %v316
    %v320 = vsel %vm317, %v314, %v310
    %v321 = vsel %vm317, %v316, %v312
    %v323 = vperm.slane %v308, 0
    %v324 = vperm.slane %v308, 1
    %v327 = vmul.f32 %v318, %v323
    %v328 = vmul.f32 %v320, %v324
    %v329 = vmul.f32 %v319, %v323
    %v330 = vmul.f32 %v321, %v324
    %s331 = scalar_lea.vmem %s6, 7
    %v332 = vld [vmem:[%s331] ss:$8 sm:$0x3]
    %333 = vrot.lane.b32.xlu0 %v171, 112
    %v334 = vpop.permute.xlu0 %333
    %335 = vrot.lane.b32.xlu0 %v173, 112
    %v336 = vpop.permute.xlu0 %335
    %337 = vrot.lane.b32.xlu0 %v172, 112
    %v338 = vpop.permute.xlu0 %337
    %339 = vrot.lane.b32.xlu0 %v174, 112
    %v340 = vpop.permute.xlu0 %339
    %vm341 = vcmp.lt.s32.totalorder %v185, 112
    %v342 = vsel %vm341, %v334, %v338
    %v343 = vsel %vm341, %v336, %v340
    %v344 = vsel %vm341, %v338, %v334
    %v345 = vsel %vm341, %v340, %v336
    %v347 = vperm.slane %v332, 0
    %v348 = vperm.slane %v332, 1
    %v351 = vmul.f32 %v342, %v347
    %v352 = vmul.f32 %v344, %v348
    %v353 = vmul.f32 %v343, %v347
    %v354 = vmul.f32 %v345, %v348
    %s355 = scalar_lea.vmem %s6, 16
    %v356 = vld [vmem:[%s355] ss:$8 sm:$0x3]
    %357 = vrot.lane.b32.xlu0 %v171, 111
    %v358 = vpop.permute.xlu0 %357
    %359 = vrot.lane.b32.xlu0 %v173, 111
    %v360 = vpop.permute.xlu0 %359
    %361 = vrot.lane.b32.xlu0 %v172, 111
    %v362 = vpop.permute.xlu0 %361
    %363 = vrot.lane.b32.xlu0 %v174, 111
    %v364 = vpop.permute.xlu0 %363
    %vm365 = vcmp.lt.s32.totalorder %v185, 111
    %v366 = vsel %vm365, %v358, %v362
    %v367 = vsel %vm365, %v360, %v364
    %v368 = vsel %vm365, %v362, %v358
    %v369 = vsel %vm365, %v364, %v360
    %v371 = vperm.slane %v356, 0
    %v372 = vperm.slane %v356, 1
    %v375 = vmul.f32 %v366, %v371
    %v376 = vmul.f32 %v368, %v372
    %v377 = vmul.f32 %v367, %v371
    %v378 = vmul.f32 %v369, %v372
    %v379 = vpack.c.bf16 %v198, %v196
    %v380 = vpack.c.bf16 %v199, %v197
    %v381 = vpack.c.bf16 %v222, %v220
    %v382 = vpack.c.bf16 %v223, %v221
    %v383 = vpack.c.bf16 %v246, %v244
    %v384 = vpack.c.bf16 %v247, %v245
    %v385 = vpack.c.bf16 %v270, %v268
    %v386 = vpack.c.bf16 %v271, %v269
    %v387 = vpack.c.bf16 %v281, %v279
    %v388 = vpack.c.bf16 %v282, %v280
    %v389 = vpack.c.bf16 %v305, %v303
    %v390 = vpack.c.bf16 %v306, %v304
    %v391 = vpack.c.bf16 %v329, %v327
    %v392 = vpack.c.bf16 %v330, %v328
    %v393 = vpack.c.bf16 %v353, %v351
    %v394 = vpack.c.bf16 %v354, %v352
    %v395 = vpack.c.bf16 %v377, %v375
    %v396 = vpack.c.bf16 %v378, %v376
    %v397 = vld [vmem:[%s2] sm:$0xff]
    %v398 = vld [vmem:[%s2 + $0x8] sm:$0xff]
    %v399 = vld [vmem:[%s3] sm:$0xff]
    %v400 = vld [vmem:[%s3 + $0x8] sm:$0xff]
    %402 = vset.pattern.permute.xlu0 0
    %403 = vperm.xlu0 %402, %v399
    %v404 = vpop.permute.xlu0 %403
    %407 = vset.pattern.permute.xlu0 0
    %408 = vperm.xlu0 %407, %v400
    %v409 = vpop.permute.xlu0 %408
    %v413 = vunpack.c.l.b16 %v397
    %v414 = vunpack.c.h.b16 %v397
    %v415 = vunpack.c.l.b16 %v398
    %v416 = vunpack.c.h.b16 %v398
    %v417 = vpack.c.b16 %v415, %v413
    %v418 = vpack.c.b16 %v416, %v414
    %v421 = vsel %vm139, %v418, 0
    %423 = vmatpush.bf16.msra.mxu0 %v393
    %424 = vmatpush.bf16.msra.mxu0 %v391
    %425 = vmatpush.bf16.msra.mxu0 %v389
    %426 = vmatpush.bf16.msra.mxu0 %v387
    %427 = vmatpush.bf16.msra.mxu0 %v385
    %428 = vmatpush.bf16.msra.mxu0 %v383
    %429 = vmatpush.bf16.msra.mxu0 %v381
    %430 = vmatpush.bf16.msra.mxu0 %v379
    %431 = vmatmul.bf16.gmra.mxu0 %v417
    %v432 = vpop.f32.mrf.mxu0
    %v433 = vadd.f32 %v404, %v432
    %v434 = vpop.f32.mrf.mxu0
    %v435 = vadd.f32 %v409, %v434
    %436 = vdwg.mxu0
    %437 = vmatpush.bf16.msra.mxu0 0
    %438 = vmatpush.bf16.msra.mxu0 0
    %439 = vmatpush.bf16.msra.mxu0 0
    %440 = vmatpush.bf16.msra.mxu0 0
    %441 = vmatpush.bf16.msra.mxu0 0
    %442 = vmatpush.bf16.msra.mxu0 0
    %443 = vmatpush.bf16.msra.mxu0 0
    %444 = vmatpush.bf16.msra.mxu0 %v395
    %445 = vmatmul.bf16.gmra.mxu0 %v421
    %v446 = vpop.f32.mrf.mxu0
    %v447 = vadd.f32 %v433, %v446
    %v448 = vpop.f32.mrf.mxu0
    %v449 = vadd.f32 %v435, %v448
    %450 = vdwg.mxu0
    %451 = vmatpush.bf16.msra.mxu0 %v394
    %452 = vmatpush.bf16.msra.mxu0 %v392
    %453 = vmatpush.bf16.msra.mxu0 %v390
    %454 = vmatpush.bf16.msra.mxu0 %v388
    %455 = vmatpush.bf16.msra.mxu0 %v386
    %456 = vmatpush.bf16.msra.mxu0 %v384
    %457 = vmatpush.bf16.msra.mxu0 %v382
    %458 = vmatpush.bf16.msra.mxu0 %v380
    %459 = vmatmul.bf16.gmra.mxu0 %v417
    %v460 = vpop.f32.mrf.mxu0
    %v461 = vadd.f32 %v404, %v460
    %v462 = vpop.f32.mrf.mxu0
    %v463 = vadd.f32 %v409, %v462
    %464 = vdwg.mxu0
    %465 = vmatpush.bf16.msra.mxu0 0
    %466 = vmatpush.bf16.msra.mxu0 0
    %467 = vmatpush.bf16.msra.mxu0 0
    %468 = vmatpush.bf16.msra.mxu0 0
    %469 = vmatpush.bf16.msra.mxu0 0
    %470 = vmatpush.bf16.msra.mxu0 0
    %471 = vmatpush.bf16.msra.mxu0 0
    %472 = vmatpush.bf16.msra.mxu0 %v396
    %473 = vmatmul.bf16.gmra.mxu0 %v421
    %v474 = vpop.f32.mrf.mxu0
    %v475 = vadd.f32 %v461, %v474
    %v476 = vpop.f32.mrf.mxu0
    %v477 = vadd.f32 %v463, %v476
    %478 = vdwg.mxu0
    %v479 = vmax.f32 %v447, 0.0
    %v480 = vmax.f32 %v475, 0.0
    %v481 = vmax.f32 %v449, 0.0
    %v482 = vmax.f32 %v477, 0.0
    %483 = vrot.lane.b32.xlu0 %v479, 17
    %v484 = vpop.permute.xlu0 %483
    %485 = vrot.lane.b32.xlu0 %v481, 17
    %v486 = vpop.permute.xlu0 %485
    %487 = vrot.lane.b32.xlu0 %v480, 17
    %v488 = vpop.permute.xlu0 %487
    %489 = vrot.lane.b32.xlu0 %v482, 17
    %v490 = vpop.permute.xlu0 %489
    %v491 = vsel %vm186, %v484, %v488
    %v492 = vsel %vm186, %v486, %v490
    %v493 = vsel %vm186, %v488, %v484
    %v494 = vsel %vm186, %v490, %v486
    %v495 = vmul.f32 %v493, %v192
    %v496 = vmul.f32 %v491, %v193
    %v497 = vmul.f32 %v494, %v192
    %v498 = vmul.f32 %v492, %v193
    %499 = vrot.lane.b32.xlu0 %v479, 16
    %v500 = vpop.permute.xlu0 %499
    %501 = vrot.lane.b32.xlu0 %v481, 16
    %v502 = vpop.permute.xlu0 %501
    %503 = vrot.lane.b32.xlu0 %v480, 16
    %v504 = vpop.permute.xlu0 %503
    %505 = vrot.lane.b32.xlu0 %v482, 16
    %v506 = vpop.permute.xlu0 %505
    %v507 = vsel %vm210, %v500, %v504
    %v508 = vsel %vm210, %v502, %v506
    %v509 = vsel %vm210, %v504, %v500
    %v510 = vsel %vm210, %v506, %v502
    %v511 = vmul.f32 %v509, %v216
    %v512 = vmul.f32 %v507, %v217
    %v513 = vmul.f32 %v510, %v216
    %v514 = vmul.f32 %v508, %v217
    %515 = vrot.lane.b32.xlu0 %v479, 15
    %v516 = vpop.permute.xlu0 %515
    %517 = vrot.lane.b32.xlu0 %v481, 15
    %v518 = vpop.permute.xlu0 %517
    %519 = vrot.lane.b32.xlu0 %v480, 15
    %v520 = vpop.permute.xlu0 %519
    %521 = vrot.lane.b32.xlu0 %v482, 15
    %v522 = vpop.permute.xlu0 %521
    %v523 = vsel %vm234, %v516, %v520
    %v524 = vsel %vm234, %v518, %v522
    %v525 = vsel %vm234, %v520, %v516
    %v526 = vsel %vm234, %v522, %v518
    %v527 = vmul.f32 %v525, %v240
    %v528 = vmul.f32 %v523, %v241
    %v529 = vmul.f32 %v526, %v240
    %v530 = vmul.f32 %v524, %v241
    %531 = vrot.lane.b32.xlu0 %v479, 1
    %v532 = vpop.permute.xlu0 %531
    %533 = vrot.lane.b32.xlu0 %v481, 1
    %v534 = vpop.permute.xlu0 %533
    %535 = vrot.lane.b32.xlu0 %v480, 1
    %v536 = vpop.permute.xlu0 %535
    %537 = vrot.lane.b32.xlu0 %v482, 1
    %v538 = vpop.permute.xlu0 %537
    %v539 = vsel %vm258, %v532, %v536
    %v540 = vsel %vm258, %v534, %v538
    %v541 = vsel %vm258, %v536, %v532
    %v542 = vsel %vm258, %v538, %v534
    %v543 = vmul.f32 %v541, %v264
    %v544 = vmul.f32 %v539, %v265
    %v545 = vmul.f32 %v542, %v264
    %v546 = vmul.f32 %v540, %v265
    %v547 = vmul.f32 %v479, %v275
    %v548 = vmul.f32 %v480, %v276
    %v549 = vmul.f32 %v481, %v275
    %v550 = vmul.f32 %v482, %v276
    %551 = vrot.lane.b32.xlu0 %v479, 127
    %v552 = vpop.permute.xlu0 %551
    %553 = vrot.lane.b32.xlu0 %v481, 127
    %v554 = vpop.permute.xlu0 %553
    %555 = vrot.lane.b32.xlu0 %v480, 127
    %v556 = vpop.permute.xlu0 %555
    %557 = vrot.lane.b32.xlu0 %v482, 127
    %v558 = vpop.permute.xlu0 %557
    %v559 = vsel %vm293, %v552, %v556
    %v560 = vsel %vm293, %v554, %v558
    %v561 = vsel %vm293, %v556, %v552
    %v562 = vsel %vm293, %v558, %v554
    %v563 = vmul.f32 %v559, %v299
    %v564 = vmul.f32 %v561, %v300
    %v565 = vmul.f32 %v560, %v299
    %v566 = vmul.f32 %v562, %v300
    %567 = vrot.lane.b32.xlu0 %v479, 113
    %v568 = vpop.permute.xlu0 %567
    %569 = vrot.lane.b32.xlu0 %v481, 113
    %v570 = vpop.permute.xlu0 %569
    %571 = vrot.lane.b32.xlu0 %v480, 113
    %v572 = vpop.permute.xlu0 %571
    %573 = vrot.lane.b32.xlu0 %v482, 113
    %v574 = vpop.permute.xlu0 %573
    %v575 = vsel %vm317, %v568, %v572
    %v576 = vsel %vm317, %v570, %v574
    %v577 = vsel %vm317, %v572, %v568
    %v578 = vsel %vm317, %v574, %v570
    %v579 = vmul.f32 %v575, %v323
    %v580 = vmul.f32 %v577, %v324
    %v581 = vmul.f32 %v576, %v323
    %v582 = vmul.f32 %v578, %v324
    %583 = vrot.lane.b32.xlu0 %v479, 112
    %v584 = vpop.permute.xlu0 %583
    %585 = vrot.lane.b32.xlu0 %v481, 112
    %v586 = vpop.permute.xlu0 %585
    %587 = vrot.lane.b32.xlu0 %v480, 112
    %v588 = vpop.permute.xlu0 %587
    %589 = vrot.lane.b32.xlu0 %v482, 112
    %v590 = vpop.permute.xlu0 %589
    %v591 = vsel %vm341, %v584, %v588
    %v592 = vsel %vm341, %v586, %v590
    %v593 = vsel %vm341, %v588, %v584
    %v594 = vsel %vm341, %v590, %v586
    %v595 = vmul.f32 %v591, %v347
    %v596 = vmul.f32 %v593, %v348
    %v597 = vmul.f32 %v592, %v347
    %v598 = vmul.f32 %v594, %v348
    %599 = vrot.lane.b32.xlu0 %v479, 111
    %v600 = vpop.permute.xlu0 %599
    %601 = vrot.lane.b32.xlu0 %v481, 111
    %v602 = vpop.permute.xlu0 %601
    %603 = vrot.lane.b32.xlu0 %v480, 111
    %v604 = vpop.permute.xlu0 %603
    %605 = vrot.lane.b32.xlu0 %v482, 111
    %v606 = vpop.permute.xlu0 %605
    %v607 = vsel %vm365, %v600, %v604
    %v608 = vsel %vm365, %v602, %v606
    %v609 = vsel %vm365, %v604, %v600
    %v610 = vsel %vm365, %v606, %v602
    %v611 = vmul.f32 %v607, %v371
    %v612 = vmul.f32 %v609, %v372
    %v613 = vmul.f32 %v608, %v371
    %v614 = vmul.f32 %v610, %v372
    %v615 = vpack.c.bf16 %v497, %v495
    %v616 = vpack.c.bf16 %v498, %v496
    %v617 = vpack.c.bf16 %v513, %v511
    %v618 = vpack.c.bf16 %v514, %v512
    %v619 = vpack.c.bf16 %v529, %v527
    %v620 = vpack.c.bf16 %v530, %v528
    %v621 = vpack.c.bf16 %v545, %v543
    %v622 = vpack.c.bf16 %v546, %v544
    %v623 = vpack.c.bf16 %v549, %v547
    %v624 = vpack.c.bf16 %v550, %v548
    %v625 = vpack.c.bf16 %v565, %v563
    %v626 = vpack.c.bf16 %v566, %v564
    %v627 = vpack.c.bf16 %v581, %v579
    %v628 = vpack.c.bf16 %v582, %v580
    %v629 = vpack.c.bf16 %v597, %v595
    %v630 = vpack.c.bf16 %v598, %v596
    %v631 = vpack.c.bf16 %v613, %v611
    %v632 = vpack.c.bf16 %v614, %v612
    %v633 = vld [vmem:[#allocation2] sm:$0xff]
    %v634 = vld [vmem:[#allocation2 + $0x8] sm:$0xff]
    %v635 = vld [vmem:[%s5] sm:$0xff]
    %v636 = vld [vmem:[%s5 + $0x8] sm:$0xff]
    %638 = vset.pattern.permute.xlu0 0
    %639 = vperm.xlu0 %638, %v635
    %v640 = vpop.permute.xlu0 %639
    %643 = vset.pattern.permute.xlu0 0
    %644 = vperm.xlu0 %643, %v636
    %v645 = vpop.permute.xlu0 %644
    %v649 = vunpack.c.l.b16 %v633
    %v650 = vunpack.c.h.b16 %v633
    %v651 = vunpack.c.l.b16 %v634
    %v652 = vunpack.c.h.b16 %v634
    %v653 = vpack.c.b16 %v651, %v649
    %v654 = vpack.c.b16 %v652, %v650
    %v657 = vsel %vm139, %v654, 0
    %659 = vmatpush.bf16.msra.mxu0 %v629
    %660 = vmatpush.bf16.msra.mxu0 %v627
    %661 = vmatpush.bf16.msra.mxu0 %v625
    %662 = vmatpush.bf16.msra.mxu0 %v623
    %663 = vmatpush.bf16.msra.mxu0 %v621
    %664 = vmatpush.bf16.msra.mxu0 %v619
    %665 = vmatpush.bf16.msra.mxu0 %v617
    %666 = vmatpush.bf16.msra.mxu0 %v615
    %667 = vmatmul.bf16.gmra.mxu0 %v653
    %v668 = vpop.f32.mrf.mxu0
    %v669 = vadd.f32 %v640, %v668
    %v670 = vpop.f32.mrf.mxu0
    %v671 = vadd.f32 %v645, %v670
    %672 = vdwg.mxu0
    %673 = vmatpush.bf16.msra.mxu0 0
    %674 = vmatpush.bf16.msra.mxu0 0
    %675 = vmatpush.bf16.msra.mxu0 0
    %676 = vmatpush.bf16.msra.mxu0 0
    %677 = vmatpush.bf16.msra.mxu0 0
    %678 = vmatpush.bf16.msra.mxu0 0
    %679 = vmatpush.bf16.msra.mxu0 0
    %680 = vmatpush.bf16.msra.mxu0 %v631
    %681 = vmatmul.bf16.gmra.mxu0 %v657
    %v682 = vpop.f32.mrf.mxu0
    %v683 = vadd.f32 %v669, %v682
    %v684 = vpop.f32.mrf.mxu0
    %v685 = vadd.f32 %v671, %v684
    %686 = vdwg.mxu0
    %687 = vmatpush.bf16.msra.mxu0 %v630
    %688 = vmatpush.bf16.msra.mxu0 %v628
    %689 = vmatpush.bf16.msra.mxu0 %v626
    %690 = vmatpush.bf16.msra.mxu0 %v624
    %691 = vmatpush.bf16.msra.mxu0 %v622
    %692 = vmatpush.bf16.msra.mxu0 %v620
    %693 = vmatpush.bf16.msra.mxu0 %v618
    %694 = vmatpush.bf16.msra.mxu0 %v616
    %695 = vmatmul.bf16.gmra.mxu0 %v653
    %v696 = vpop.f32.mrf.mxu0
    %v697 = vadd.f32 %v640, %v696
    %v698 = vpop.f32.mrf.mxu0
    %v699 = vadd.f32 %v645, %v698
    %700 = vdwg.mxu0
    %701 = vmatpush.bf16.msra.mxu0 0
    %702 = vmatpush.bf16.msra.mxu0 0
    %703 = vmatpush.bf16.msra.mxu0 0
    %704 = vmatpush.bf16.msra.mxu0 0
    %705 = vmatpush.bf16.msra.mxu0 0
    %706 = vmatpush.bf16.msra.mxu0 0
    %707 = vmatpush.bf16.msra.mxu0 0
    %708 = vmatpush.bf16.msra.mxu0 %v632
    %709 = vmatmul.bf16.gmra.mxu0 %v657
    %v710 = vpop.f32.mrf.mxu0
    %v711 = vadd.f32 %v697, %v710
    %v712 = vpop.f32.mrf.mxu0
    %v713 = vadd.f32 %v699, %v712
    %714 = vdwg.mxu0
    %v715 = vmul.f32 %v683, 0.25
    %v716 = vmul.f32 %v711, 0.25
    %v717 = vmul.f32 %v685, 0.25
    %v718 = vmul.f32 %v713, 0.25
    %v719 = vmul.f32 %v100, 0.25
    %v720 = vmul.f32 %v101, 0.25
    %v721 = vmul.f32 %v102, 0.25
    %v722 = vmul.f32 %v103, 0.25
    %v723 = vmax.f32 %v715, %v716
    %724 = vmax.xlane.f32.xlu0 %v723
    %v725 = vpop.xlane.xlu0 %724
    %v726 = vmax.f32 %v717, %v718
    %727 = vmax.xlane.f32.xlu0 %v726
    %v728 = vpop.xlane.xlu0 %727
    %v729 = vsub.f32 %v715, %v725
    %v730 = vsub.f32 %v716, %v725
    %v731 = vsub.f32 %v717, %v728
    %v732 = vsub.f32 %v718, %v728
    %v733 = vmul.f32 %v729, 1.442695
    %v734 = vpow.pop %v733
    %v735 = vmul.f32 %v730, 1.442695
    %v736 = vpow.pop %v735
    %v737 = vmul.f32 %v731, 1.442695
    %v738 = vpow.pop %v737
    %v739 = vmul.f32 %v732, 1.442695
    %v740 = vpow.pop %v739
    %v741 = vadd.f32 %v734, %v736
    %742 = vadd.xlane.f32.xlu0 %v741
    %v743 = vpop.xlane.xlu0 %742
    %v744 = vadd.f32 %v738, %v740
    %745 = vadd.xlane.f32.xlu0 %v744
    %v746 = vpop.xlane.xlu0 %745
    %v747 = vmax.f32 %v719, %v720
    %748 = vmax.xlane.f32.xlu0 %v747
    %v749 = vpop.xlane.xlu0 %748
    %v750 = vmax.f32 %v721, %v722
    %751 = vmax.xlane.f32.xlu0 %v750
    %v752 = vpop.xlane.xlu0 %751
    %v753 = vsub.f32 %v719, %v749
    %v754 = vsub.f32 %v720, %v749
    %v755 = vsub.f32 %v721, %v752
    %v756 = vsub.f32 %v722, %v752
    %v757 = vmul.f32 %v753, 1.442695
    %v758 = vpow.pop %v757
    %v759 = vmul.f32 %v754, 1.442695
    %v760 = vpow.pop %v759
    %v761 = vmul.f32 %v755, 1.442695
    %v762 = vpow.pop %v761
    %v763 = vmul.f32 %v756, 1.442695
    %v764 = vpow.pop %v763
    %v765 = vadd.f32 %v758, %v760
    %766 = vadd.xlane.f32.xlu0 %v765
    %v767 = vpop.xlane.xlu0 %766
    %v768 = vadd.f32 %v762, %v764
    %769 = vadd.xlane.f32.xlu0 %v768
    %v770 = vpop.xlane.xlu0 %769
    %v771 = vsub.f32 %v719, %v715
    %v772 = vsub.f32 %v720, %v716
    %v773 = vsub.f32 %v721, %v717
    %v774 = vsub.f32 %v722, %v718
    %v775 = vsub.f32 %v749, %v725
    %v776 = vsub.f32 %v752, %v728
    %v777 = vsub.f32 %v771, %v775
    %v778 = vsub.f32 %v772, %v775
    %v779 = vsub.f32 %v773, %v776
    %v780 = vsub.f32 %v774, %v776
    %v781 = vlog2.pop %v767
    %v782 = vmul.f32 %v781, 0.6931472
    %v783 = vlog2.pop %v770
    %v784 = vmul.f32 %v783, 0.6931472
    %v785 = vlog2.pop %v743
    %v786 = vmul.f32 %v785, 0.6931472
    %v787 = vlog2.pop %v746
    %v788 = vmul.f32 %v787, 0.6931472
    %v789 = vsub.f32 %v782, %v786
    %v790 = vsub.f32 %v784, %v788
    %v791 = vsub.f32 %v777, %v789
    %v792 = vsub.f32 %v778, %v789
    %v793 = vsub.f32 %v779, %v790
    %v794 = vsub.f32 %v780, %v790
    %v795 = vmul.f32 %v758, %v791
    %v796 = vmul.f32 %v760, %v792
    %v797 = vmul.f32 %v762, %v793
    %v798 = vmul.f32 %v764, %v794
    %v799 = vadd.f32 %v795, %v796
    %800 = vadd.xlane.f32.xlu0 %v799
    %v801 = vpop.xlane.xlu0 %800
    %v802 = vadd.f32 %v797, %v798
    %803 = vadd.xlane.f32.xlu0 %v802
    %v804 = vpop.xlane.xlu0 %803
    %v805 = vrcp.pop %v767
    %v806 = vmul.f32 %v767, %v805
    %v807 = vsub.f32 1.0, %v806
    %v808 = vmul.f32 %v805, %v807
    %v809 = vadd.f32 %v805, %v808
    %vm810 = vweird.f32 %v767
    %vm811 = vweird.f32 %v805
    %vm812 = vmor %vm810, %vm811
    %v813 = vsel %vm812, %v805, %v809
    %v814 = vand.u32 2147483647, %v767
    %vm815 = vcmp.eq.f32.partialorder %v814, 8.507059e+37
    %v816 = vand.u32 %v767, 2147483648
    %v817 = vor.u32 1.1754944e-38, %v816
    %v818 = vsel %vm815, %v817, %v813
    %v819 = vmul.f32 %v801, %v818
    %v820 = vrcp.pop %v770
    %v821 = vmul.f32 %v770, %v820
    %v822 = vsub.f32 1.0, %v821
    %v823 = vmul.f32 %v820, %v822
    %v824 = vadd.f32 %v820, %v823
    %vm825 = vweird.f32 %v770
    %vm826 = vweird.f32 %v820
    %vm827 = vmor %vm825, %vm826
    %v828 = vsel %vm827, %v820, %v824
    %v829 = vand.u32 2147483647, %v770
    %vm830 = vcmp.eq.f32.partialorder %v829, 8.507059e+37
    %v831 = vand.u32 %v770, 2147483648
    %v832 = vor.u32 1.1754944e-38, %v831
    %v833 = vsel %vm830, %v832, %v828
    %v834 = vmul.f32 %v804, %v833
    %v835 = vadd.f32 %v819, %v834
    %v836 = vrot.slane %v835, 4
    %v837 = vadd.f32 %v835, %v836
    %v838 = vrot.slane %v837, 2
    %v839 = vadd.f32 %v837, %v838
    %v840 = vrot.slane %v839, 1
    %v841 = vadd.f32 %v839, %v840
    %v842 = vmul.f32 %v841, 290.0
    %vm843 = vcmask 0
    %844 = vst.msk [vmem:[#allocation10] sm:$0x1] %vm843, %v842
    // Predicated region
    $region58: #{tpu_custom_call.1} parent=1 // pred_check
      _
    $region59: #{tpu_custom_call.1} parent=1 // pred_check_branch
      %846 = sbr.rel (0) target = $region61
    $region60: #{tpu_custom_call.1} parent=1 // pred_region
      %848 = vsyncadd [#allocation4], 0
      %s850 = sshll.u32 [#allocation10], 4
      %s851 = int_to_ptr.vmem [resolvable:$true] %s850
      %s852 = sshll.u32 %s10, 4
      %s853 = int_to_ptr.hbm [resolvable:$true] %s852
      %855 = dma.vmem_to_hbm [thread:$0]  %s851, 16, %s853, [#allocation4]
    $region61: #{tpu_custom_call.1} parent=1 // pred_fallthru
      _
    // Predicated region
    $region62: #{tpu_custom_call.1} parent=1 // pred_check
      _
    $region63: #{tpu_custom_call.1} parent=1 // pred_check_branch
      %857 = sbr.rel (0) target = $region65
    $region64: #{tpu_custom_call.1} parent=1 // pred_region
      %859 = dma.done [#allocation4], 16
    $region65: #{tpu_custom_call.1} parent=1 // pred_fallthru
      _
    %860 = vsyncpa [#allocation3], 1
    %861 = vsyncpa [#allocation6], 1
    %862 = vsyncpa [#allocation9], 1
    %863 = vsyncpa [#allocation4], 1

</llo_original>
